<compile_context>
chip_gen: v7x
topology: tpu7x:2x2x1
jax: 0.10.0
libtpu: 0.0.40
codegen_flags: <defaults>
</compile_context>

<pallas_src>
import functools

import jax
import jax.numpy as jnp
from jax.experimental import pallas as pl
from jax.experimental.pallas import tpu as pltpu


def _lrelu_bn_drop_kernel(x_ref, gamma_ref, beta_ref, keep_ref, out_ref, *,
                          eps, negative_slope, inv_count):
    # ---- LeakyReLU (VPU elementwise) ---------------------------------------
    x = x_ref[...].astype(jnp.float32)                    # (N, Cb, HW)
    y = jnp.where(x > 0, x, negative_slope * x)

    # ---- BatchNorm2d: single-pass per-channel batch statistics -------------
    s1 = jnp.sum(y, axis=(0, 2), keepdims=True)            # (1, Cb, 1)
    s2 = jnp.sum(y * y, axis=(0, 2), keepdims=True)        # (1, Cb, 1)
    mean = s1 * inv_count
    var = s2 * inv_count - mean * mean                     # biased variance
    inv_std = jax.lax.rsqrt(var + eps)

    gamma = gamma_ref[...]                                  # (1, Cb, 1) f32
    beta = beta_ref[...]                                    # (1, Cb, 1) f32
    scale = gamma * inv_std
    shift = beta - mean * scale

    # ---- Dropout2d: per-(n, c) keep/scale mask (0 or 1/(1-p)), precomputed --
    keep = keep_ref[...]                                    # (N, Cb, 1) f32
    out_ref[...] = ((y * scale + shift) * keep).astype(out_ref.dtype)


def _pick_channel_block(N, C, HW, target_bytes=4 * 1024 * 1024):
    """Largest channel block whose f32 slab fits a conservative VMEM budget.

    Budget is sized so (double-buffered in + out tiles + f32 temporaries)
    stays well under the 64 MiB v7x VMEM per TensorCore (generous on v5e/v6e).
    """
    per_channel = N * HW * 4
    max_cb = max(1, target_bytes // per_channel)
    if C <= max_cb:
        return C
    cb = (max_cb // 8) * 8            # second-minor block dim must be 8-aligned
    while cb >= 8:
        if C % cb == 0:
            return cb
        cb -= 8
    # TODO(synk): for huge N*H*W per channel, add a spatial grid axis with a
    # two-pass (accumulate stats, then normalize) BN instead of this fallback.
    return C


def lrelu_bn2d_drop2d(x_nchw, gamma, beta, rng_key, *,
                      eps=1e-5, negative_slope=0.01, drop_p=0.1,
                      training=True):
    N, C, H, W = x_nchw.shape
    HW = H * W
    x = x_nchw.reshape(N, C, HW)                 # free view, no transpose

    cb = _pick_channel_block(N, C, HW)
    grid = (C // cb,)

    gamma3 = gamma.astype(jnp.float32).reshape(1, C, 1)
    beta3 = beta.astype(jnp.float32).reshape(1, C, 1)

    # Dropout2d keep/scale mask: one Bernoulli per (n, c) whole channel.
    if training and drop_p > 0.0:
        u = jax.random.uniform(rng_key, (N, C, 1), dtype=jnp.float32)
        keep = jnp.where(u >= drop_p,
                         jnp.float32(1.0 / (1.0 - drop_p)),
                         jnp.float32(0.0))
    else:
        keep = jnp.ones((N, C, 1), dtype=jnp.float32)

    kernel = functools.partial(
        _lrelu_bn_drop_kernel,
        eps=float(eps),
        negative_slope=float(negative_slope),
        inv_count=1.0 / float(N * HW))

    out = pl.pallas_call(
        kernel,
        out_shape=jax.ShapeDtypeStruct((N, C, HW), x_nchw.dtype),
        grid=grid,
        in_specs=[
            pl.BlockSpec((N, cb, HW), lambda c: (0, c, 0)),   # x channel slab
            pl.BlockSpec((1, cb, 1), lambda c: (0, c, 0)),    # gamma
            pl.BlockSpec((1, cb, 1), lambda c: (0, c, 0)),    # beta
            pl.BlockSpec((N, cb, 1), lambda c: (0, c, 0)),    # dropout mask
        ],
        out_specs=pl.BlockSpec((N, cb, HW), lambda c: (0, c, 0)),
        compiler_params=pltpu.CompilerParams(
            dimension_semantics=("parallel",),      # shard channel blocks (v7x 2 TCs)
            vmem_limit_bytes=64 * 1024 * 1024),
    )(x, gamma3, beta3, keep)

    return out.reshape(N, C, H, W)                # free view, no transpose


def _reference_no_dropout(x_nchw, gamma, beta, *, eps=1e-5, negative_slope=0.01):
    """Pure-JAX reference of BatchNorm2d(LeakyReLU(x)) for correctness checks."""
    x = x_nchw.astype(jnp.float32)
    y = jnp.where(x > 0, x, negative_slope * x)
    mean = jnp.mean(y, axis=(0, 2, 3), keepdims=True)
    var = jnp.mean((y - mean) ** 2, axis=(0, 2, 3), keepdims=True)
    g = gamma.reshape(1, -1, 1, 1)
    b = beta.reshape(1, -1, 1, 1)
    return g * (y - mean) / jnp.sqrt(var + eps) + b


if __name__ == "__main__":
    N, C, H, W = 2, 4, 16, 16
    drop_p = 0.1

    key = jax.random.PRNGKey(0)
    x_key, drop_key = jax.random.split(key)
    x = jax.random.normal(x_key, (N, C, H, W), dtype=jnp.float32)

    # Deterministic parameter init, matching nn.BatchNorm2d defaults.
    gamma = jnp.ones((C,), dtype=jnp.float32)    # bn.weight
    beta = jnp.zeros((C,), dtype=jnp.float32)    # bn.bias

    out = lrelu_bn2d_drop2d(x, gamma, beta, drop_key, drop_p=drop_p)
    out = jax.block_until_ready(out)
    assert out.shape == (N, C, H, W) and out.dtype == x.dtype

    # Sanity check: per-(n, c) channel, the output is either all-zero (dropped)
    # or equals BatchNorm2d(LeakyReLU(x)) scaled by 1/(1-p) (kept).
    ref = _reference_no_dropout(x, gamma, beta)
    scale = 1.0 / (1.0 - drop_p)
    ok = True
    for n in range(N):
        for c in range(C):
            o = out[n, c]
            r = ref[n, c]
            dropped = bool(jnp.max(jnp.abs(o)) == 0.0)
            kept = bool(jnp.max(jnp.abs(o - r * scale)) < 1e-4)
            ok &= (dropped or kept)
    assert ok, "kernel output does not match LeakyReLU+BN+Dropout2d semantics"

    print("KERNEL_OK")
</pallas_src>

<mosaic_0001>
module attributes {stable_mosaic.version = 11 : i64} {
  func.func @_lrelu_bn_drop_kernel(%arg0: i32, %arg1: memref<2x4x256xf32, #tpu.memory_space<vmem>>, %arg2: memref<1x4x1xf32, #tpu.memory_space<vmem>>, %arg3: memref<1x4x1xf32, #tpu.memory_space<vmem>>, %arg4: memref<2x4x1xf32, #tpu.memory_space<vmem>>, %arg5: memref<2x4x256xf32, #tpu.memory_space<vmem>>) attributes {dimension_semantics = [#tpu.dimension_semantics<parallel>], iteration_bounds = array<i64: 1>, scalar_prefetch = 0 : i64, scratch_operands = 0 : i64, tpu.core_type = #tpu.core_type<tc>, window_params = [{transform_indices = @transform_0, window_bounds = array<i64: 2, 4, 256>}, {transform_indices = @transform_1, window_bounds = array<i64: 1, 4, 1>}, {transform_indices = @transform_2, window_bounds = array<i64: 1, 4, 1>}, {transform_indices = @transform_3, window_bounds = array<i64: 2, 4, 1>}, {transform_indices = @transform_4, window_bounds = array<i64: 2, 4, 256>}]} {
    %c0 = arith.constant 0 : index
    %c0_0 = arith.constant 0 : index
    %c0_1 = arith.constant 0 : index
    %0 = vector.load %arg1[%c0, %c0_0, %c0_1] : memref<2x4x256xf32, #tpu.memory_space<vmem>>, vector<2x4x256xf32>
    %cst = arith.constant 0.000000e+00 : f32
    %1 = vector.broadcast %cst : f32 to vector<2x4x256xf32>
    %2 = arith.cmpf ogt, %0, %1 : vector<2x4x256xf32>
    %cst_2 = arith.constant 0.00999999977 : f32
    %3 = vector.broadcast %cst_2 : f32 to vector<2x4x256xf32>
    %4 = arith.mulf %3, %0 : vector<2x4x256xf32>
    %5 = arith.select %2, %0, %4 : vector<2x4x256xi1>, vector<2x4x256xf32>
    %cst_3 = arith.constant dense<0.000000e+00> : vector<4xf32>
    %6 = vector.multi_reduction <add>, %5, %cst_3 [0, 2] : vector<2x4x256xf32> to vector<4xf32>
    %7 = vector.shape_cast %6 : vector<4xf32> to vector<1x4x1xf32>
    %8 = arith.mulf %5, %5 : vector<2x4x256xf32>
    %cst_4 = arith.constant dense<0.000000e+00> : vector<4xf32>
    %9 = vector.multi_reduction <add>, %8, %cst_4 [0, 2] : vector<2x4x256xf32> to vector<4xf32>
    %10 = vector.shape_cast %9 : vector<4xf32> to vector<1x4x1xf32>
    %cst_5 = arith.constant 0.001953125 : f32
    %11 = vector.broadcast %cst_5 : f32 to vector<1x4x1xf32>
    %12 = arith.mulf %7, %11 : vector<1x4x1xf32>
    %cst_6 = arith.constant 0.001953125 : f32
    %13 = vector.broadcast %cst_6 : f32 to vector<1x4x1xf32>
    %14 = arith.mulf %10, %13 : vector<1x4x1xf32>
    %15 = arith.mulf %12, %12 : vector<1x4x1xf32>
    %16 = arith.subf %14, %15 : vector<1x4x1xf32>
    %cst_7 = arith.constant 9.99999974E-6 : f32
    %17 = vector.broadcast %cst_7 : f32 to vector<1x4x1xf32>
    %18 = arith.addf %16, %17 : vector<1x4x1xf32>
    %19 = math.rsqrt %18 : vector<1x4x1xf32>
    %c0_8 = arith.constant 0 : index
    %c0_9 = arith.constant 0 : index
    %c0_10 = arith.constant 0 : index
    %20 = vector.load %arg2[%c0_8, %c0_9, %c0_10] : memref<1x4x1xf32, #tpu.memory_space<vmem>>, vector<1x4x1xf32>
    %c0_11 = arith.constant 0 : index
    %c0_12 = arith.constant 0 : index
    %c0_13 = arith.constant 0 : index
    %21 = vector.load %arg3[%c0_11, %c0_12, %c0_13] : memref<1x4x1xf32, #tpu.memory_space<vmem>>, vector<1x4x1xf32>
    %22 = arith.mulf %20, %19 : vector<1x4x1xf32>
    %23 = arith.mulf %12, %22 : vector<1x4x1xf32>
    %24 = arith.subf %21, %23 : vector<1x4x1xf32>
    %c0_14 = arith.constant 0 : index
    %c0_15 = arith.constant 0 : index
    %c0_16 = arith.constant 0 : index
    %25 = vector.load %arg4[%c0_14, %c0_15, %c0_16] : memref<2x4x1xf32, #tpu.memory_space<vmem>>, vector<2x4x1xf32>
    %26 = vector.broadcast %22 : vector<1x4x1xf32> to vector<2x4x256xf32>
    %27 = arith.mulf %5, %26 : vector<2x4x256xf32>
    %28 = vector.broadcast %24 : vector<1x4x1xf32> to vector<2x4x256xf32>
    %29 = arith.addf %27, %28 : vector<2x4x256xf32>
    %30 = vector.broadcast %25 : vector<2x4x1xf32> to vector<2x4x256xf32>
    %31 = arith.mulf %29, %30 : vector<2x4x256xf32>
    %c0_17 = arith.constant 0 : index
    %c0_18 = arith.constant 0 : index
    %c0_19 = arith.constant 0 : index
    %32 = vector.load %arg5[%c0_17, %c0_18, %c0_19] : memref<2x4x256xf32, #tpu.memory_space<vmem>>, vector<2x4x256xf32>
    tpu.vector_store %arg5[%c0_17, %c0_18, %c0_19], %31 {strides = array<i32>} : memref<2x4x256xf32, #tpu.memory_space<vmem>>, vector<2x4x256xf32>,
    return
  }
  func.func @transform_0(%arg0: i32) -> (i32, i32, i32) {
    %c0_i32 = arith.constant 0 : i32
    %c0_i32_0 = arith.constant 0 : i32
    %c0_i32_1 = arith.constant 0 : i32
    return %c0_i32, %arg0, %c0_i32_0 : i32, i32, i32
  }
  func.func @transform_1(%arg0: i32) -> (i32, i32, i32) {
    %c0_i32 = arith.constant 0 : i32
    %c0_i32_0 = arith.constant 0 : i32
    %c0_i32_1 = arith.constant 0 : i32
    return %c0_i32, %arg0, %c0_i32_0 : i32, i32, i32
  }
  func.func @transform_2(%arg0: i32) -> (i32, i32, i32) {
    %c0_i32 = arith.constant 0 : i32
    %c0_i32_0 = arith.constant 0 : i32
    %c0_i32_1 = arith.constant 0 : i32
    return %c0_i32, %arg0, %c0_i32_0 : i32, i32, i32
  }
  func.func @transform_3(%arg0: i32) -> (i32, i32, i32) {
    %c0_i32 = arith.constant 0 : i32
    %c0_i32_0 = arith.constant 0 : i32
    %c0_i32_1 = arith.constant 0 : i32
    return %c0_i32, %arg0, %c0_i32_0 : i32, i32, i32
  }
  func.func @transform_4(%arg0: i32) -> (i32, i32, i32) {
    %c0_i32 = arith.constant 0 : i32
    %c0_i32_0 = arith.constant 0 : i32
    %c0_i32_1 = arith.constant 0 : i32
    return %c0_i32, %arg0, %c0_i32_0 : i32, i32, i32
  }
}

</mosaic_0001>

<llo_original>
// kernel: tpu_custom_call.1
$region0: #{tpu_custom_call.1}
  #allocation0 [shape = 'u32[]', space=smem, size = 0x4, offset = 0x4, fixed_abs, tag = 'smem constant byte address 0x4 - core index']
  #allocation1 [shape = 'u32[144,128]{1,0:T(1,128)}', space=vmem, size = 0x12000, scoped, tag = 'internal scratch']
  %s0 = inlined_call_operand.hbm [shape: f32[2,4,256], index: 0, kind: input, shape index: {}]
  %s1 = inlined_call_operand.hbm [shape: f32[1,4,1], index: 1, kind: input, shape index: {}]
  %s2 = inlined_call_operand.hbm [shape: f32[1,4,1], index: 2, kind: input, shape index: {}]
  %s3 = inlined_call_operand.hbm [shape: f32[2,4,1], index: 3, kind: input, shape index: {}]
  %s4 = inlined_call_operand.hbm [shape: f32[2,4,256], index: 4, kind: output, shape index: {}]
  %s5 = sld [smem:[#allocation0]]
  $region42: #{tpu_custom_call.1} parent=0
    _
  %s7 = ssub.s32 1, %s5
  %s8 = scalar_select 0, %s7, %s5
  $region1: #{tpu_custom_call.1} parent=0
    #allocation2 [shape = 'u8[8192]{0}', space=vmem, size = 0x2000, scoped, tag = 'input window, operand 0, single buffered']
    #allocation3 [shape = 's32[1]{0}', space=sflag, size = 0x4, scoped, tag = 'scoped memory for tpu_custom_call.1']
    #allocation4 [shape = 's32[1]{0}', space=sflag, size = 0x4, scoped, tag = 'scoped memory for tpu_custom_call.1']
    #allocation5 [shape = 'u8[2048]{0}', space=vmem, size = 0x800, scoped, tag = 'input window, operand 1, single buffered']
    #allocation6 [shape = 's32[1]{0}', space=sflag, size = 0x4, scoped, tag = 'scoped memory for tpu_custom_call.1']
    #allocation7 [shape = 'u8[2048]{0}', space=vmem, size = 0x800, scoped, tag = 'input window, operand 2, single buffered']
    #allocation8 [shape = 'u8[4096]{0}', space=vmem, size = 0x1000, scoped, tag = 'input window, operand 3, single buffered']
    #allocation9 [shape = 's32[1]{0}', space=sflag, size = 0x4, scoped, tag = 'scoped memory for tpu_custom_call.1']
    #allocation10 [shape = 'u8[8192]{0}', space=vmem, size = 0x2000, scoped, tag = 'output window, operand 0, single buffered']
    %9 = vsyncpa [#allocation3], 0
    %10 = vsyncpa [#allocation6], 0
    %11 = vsyncpa [#allocation9], 0
    %12 = vsyncpa [#allocation4], 0
    // Predicated region
    $region2: #{tpu_custom_call.1} parent=1 // pred_check
      _
    $region3: #{tpu_custom_call.1} parent=1 // pred_check_branch
      %14 = sbr.rel (0) target = $region5
    $region4: #{tpu_custom_call.1} parent=1 // pred_region
      %s16 = ssub.s32 256, 256
      %17 = vsyncadd [#allocation3], %s16
      %s18 = sshll.u32 [#allocation2], 4
      %s19 = int_to_ptr.vmem [resolvable:$true] %s18
      %24 = dma.hbm_to_vmem [thread:$0]  %s0, 256, %s19, [#allocation3], 128, 128, 8
    $region5: #{tpu_custom_call.1} parent=1 // pred_fallthru
      _
    // Predicated region
    $region6: #{tpu_custom_call.1} parent=1 // pred_check
      _
    $region7: #{tpu_custom_call.1} parent=1 // pred_check_branch
      %26 = sbr.rel (0) target = $region9
    $region8: #{tpu_custom_call.1} parent=1 // pred_region
      %s28 = ssub.s32 64, 64
      %29 = vsyncadd [#allocation6], %s28
      %s31 = sshll.u32 [#allocation5], 4
      %s32 = int_to_ptr.vmem [resolvable:$true] %s31
      %34 = dma.hbm_to_vmem [thread:$0]  %s1, 64, %s32, [#allocation6]
    $region9: #{tpu_custom_call.1} parent=1 // pred_fallthru
      _
    // Predicated region
    $region10: #{tpu_custom_call.1} parent=1 // pred_check
      _
    $region11: #{tpu_custom_call.1} parent=1 // pred_check_branch
      %36 = sbr.rel (0) target = $region13
    $region12: #{tpu_custom_call.1} parent=1 // pred_region
      %s38 = ssub.s32 64, 64
      %39 = vsyncadd [#allocation6], %s38
      %s41 = sshll.u32 [#allocation7], 4
      %s42 = int_to_ptr.vmem [resolvable:$true] %s41
      %44 = dma.hbm_to_vmem [thread:$0]  %s2, 64, %s42, [#allocation6]
    $region13: #{tpu_custom_call.1} parent=1 // pred_fallthru
      _
    // Predicated region
    $region14: #{tpu_custom_call.1} parent=1 // pred_check
      _
    $region15: #{tpu_custom_call.1} parent=1 // pred_check_branch
      %46 = sbr.rel (0) target = $region17
    $region16: #{tpu_custom_call.1} parent=1 // pred_region
      %s48 = ssub.s32 128, 128
      %49 = vsyncadd [#allocation9], %s48
      %s50 = sshll.u32 [#allocation8], 4
      %s51 = int_to_ptr.vmem [resolvable:$true] %s50
      %56 = dma.hbm_to_vmem [thread:$0]  %s3, 128, %s51, [#allocation9], 64, 64, 4
    $region17: #{tpu_custom_call.1} parent=1 // pred_fallthru
      _
    // Predicated region
    $region18: #{tpu_custom_call.1} parent=1 // pred_check
      _
    $region19: #{tpu_custom_call.1} parent=1 // pred_check_branch
      %58 = sbr.rel (0) target = $region21
    $region20: #{tpu_custom_call.1} parent=1 // pred_region
      %59 = dma.done [#allocation3], 256
    $region21: #{tpu_custom_call.1} parent=1 // pred_fallthru
      _
    // Predicated region
    $region22: #{tpu_custom_call.1} parent=1 // pred_check
      _
    $region23: #{tpu_custom_call.1} parent=1 // pred_check_branch
      %61 = sbr.rel (0) target = $region25
    $region24: #{tpu_custom_call.1} parent=1 // pred_region
      %62 = dma.done [#allocation6], 64
    $region25: #{tpu_custom_call.1} parent=1 // pred_fallthru
      _
    // Predicated region
    $region26: #{tpu_custom_call.1} parent=1 // pred_check
      _
    $region27: #{tpu_custom_call.1} parent=1 // pred_check_branch
      %64 = sbr.rel (0) target = $region29
    $region28: #{tpu_custom_call.1} parent=1 // pred_region
      %65 = dma.done [#allocation6], 64
    $region29: #{tpu_custom_call.1} parent=1 // pred_fallthru
      _
    // Predicated region
    $region30: #{tpu_custom_call.1} parent=1 // pred_check
      _
    $region31: #{tpu_custom_call.1} parent=1 // pred_check_branch
      %67 = sbr.rel (0) target = $region33
    $region32: #{tpu_custom_call.1} parent=1 // pred_region
      %68 = dma.done [#allocation9], 128
    $region33: #{tpu_custom_call.1} parent=1 // pred_fallthru
      _
    %v69 = vld [vmem:[#allocation2] sm:$0xff]
    %v70 = vld [vmem:[#allocation2 + $0x8] sm:$0xff]
    %vm71 = vcmp.gt.f32.partialorder %v69, 0.0
    %vm72 = vcmp.gt.f32.partialorder %v70, 0.0
    %v73 = vmul.f32 %v69, 0.01
    %v74 = vmul.f32 %v70, 0.01
    %v75 = vsel %vm71, %v69, %v73
    %v76 = vsel %vm72, %v70, %v74
    %v79 = vcombine.high %v75, %v75
    %v80 = vcombine.high %v76, %v76
    %vm83 = vcmask 1043456
    %v84 = vsel %vm83, %v75, 0.0
    %v85 = vsel %vm83, %v79, 0.0
    %v86 = vadd.f32 %v84, %v85
    %v87 = vsel %vm83, %v76, 0.0
    %v88 = vadd.f32 %v86, %v87
    %v89 = vsel %vm83, %v80, 0.0
    %v90 = vadd.f32 %v88, %v89
    %91 = vadd.xlane.f32.xlu0 %v90
    %v92 = vpop.xlane.xlu0 %91
    %v93 = vmul.f32 %v75, %v75
    %v94 = vmul.f32 %v76, %v76
    %v97 = vcombine.high %v93, %v93
    %v98 = vcombine.high %v94, %v94
    %v101 = vsel %vm83, %v93, 0.0
    %v102 = vsel %vm83, %v97, 0.0
    %v103 = vadd.f32 %v101, %v102
    %v104 = vsel %vm83, %v94, 0.0
    %v105 = vadd.f32 %v103, %v104
    %v106 = vsel %vm83, %v98, 0.0
    %v107 = vadd.f32 %v105, %v106
    %108 = vadd.xlane.f32.xlu0 %v107
    %v109 = vpop.xlane.xlu0 %108
    %v110 = vmul.f32 %v92, 0.001953125
    %v111 = vmul.f32 %v109, 0.001953125
    %v112 = vmul.f32 %v110, %v110
    %v113 = vsub.f32 %v111, %v112
    %v114 = vadd.f32 %v113, 1e-05
    %v115 = vrsqrt.pop %v114
    %v116 = vld [vmem:[#allocation5] sm:$0xf]
    %v117 = vld [vmem:[#allocation7] sm:$0xf]
    %v118 = vmul.f32 %v116, %v115
    %v119 = vmul.f32 %v110, %v118
    %v120 = vsub.f32 %v117, %v119
    %v121 = vld [vmem:[#allocation8] sm:$0xf]
    %v122 = vld [vmem:[#allocation8 + $0x4] sm:$0xf]
    %124 = vset.pattern.permute.xlu0 0
    %125 = vperm.xlu0 %124, %v118
    %v126 = vpop.permute.xlu0 %125
    %v128 = vunpack.c.l.s4 839922192
    %v129 = vunpack.c.0.s8 %v128
    %v130 = vlaneseq
    %v131 = vshrl.u32 %v130, 7
    %v132 = vsub.s32 %v129, %v131
    %v133 = vrot.slane %v126, %v132
    %v135 = vmul.f32 %v75, %v133
    %v136 = vmul.f32 %v76, %v133
    %138 = vset.pattern.permute.xlu0 0
    %139 = vperm.xlu0 %138, %v120
    %v140 = vpop.permute.xlu0 %139
    %v142 = vunpack.c.l.s4 839922192
    %v143 = vunpack.c.0.s8 %v142
    %v144 = vlaneseq
    %v145 = vshrl.u32 %v144, 7
    %v146 = vsub.s32 %v143, %v145
    %v147 = vrot.slane %v140, %v146
    %v149 = vadd.f32 %v135, %v147
    %v150 = vadd.f32 %v136, %v147
    %152 = vset.pattern.permute.xlu0 0
    %153 = vperm.xlu0 %152, %v121
    %v154 = vpop.permute.xlu0 %153
    %156 = vset.pattern.permute.xlu0 0
    %157 = vperm.xlu0 %156, %v122
    %v158 = vpop.permute.xlu0 %157
    %v160 = vunpack.c.l.s4 839922192
    %v161 = vunpack.c.0.s8 %v160
    %v162 = vlaneseq
    %v163 = vshrl.u32 %v162, 7
    %v164 = vsub.s32 %v161, %v163
    %v165 = vrot.slane %v154, %v164
    %v167 = vunpack.c.l.s4 839922192
    %v168 = vunpack.c.0.s8 %v167
    %v169 = vlaneseq
    %v170 = vshrl.u32 %v169, 7
    %v171 = vsub.s32 %v168, %v170
    %v172 = vrot.slane %v158, %v171
    %v175 = vmul.f32 %v149, %v165
    %v176 = vmul.f32 %v150, %v172
    %177 = vst [vmem:[#allocation10] sm:$0xff] %v175
    %178 = vst [vmem:[#allocation10 + $0x8] sm:$0xff] %v176
    // Predicated region
    $region34: #{tpu_custom_call.1} parent=1 // pred_check
      _
    $region35: #{tpu_custom_call.1} parent=1 // pred_check_branch
      %180 = sbr.rel (0) target = $region37
    $region36: #{tpu_custom_call.1} parent=1 // pred_region
      %s182 = ssub.s32 256, 256
      %183 = vsyncadd [#allocation4], %s182
      %s184 = sshll.u32 [#allocation10], 4
      %s185 = int_to_ptr.vmem [resolvable:$true] %s184
      %190 = dma.vmem_to_hbm [thread:$0]  %s185, 256, %s4, [#allocation4], 128, 128, 8
    $region37: #{tpu_custom_call.1} parent=1 // pred_fallthru
      _
    // Predicated region
    $region38: #{tpu_custom_call.1} parent=1 // pred_check
      _
    $region39: #{tpu_custom_call.1} parent=1 // pred_check_branch
      %192 = sbr.rel (0) target = $region41
    $region40: #{tpu_custom_call.1} parent=1 // pred_region
      %193 = dma.done [#allocation4], 256
    $region41: #{tpu_custom_call.1} parent=1 // pred_fallthru
      _
    %194 = vsyncpa [#allocation3], 1
    %195 = vsyncpa [#allocation6], 1
    %196 = vsyncpa [#allocation9], 1
    %197 = vsyncpa [#allocation4], 1

</llo_original>
